<compile_context>
chip_gen: v5e
topology: v5e:2x2
jax: 0.10.0
libtpu: 0.0.40
codegen_flags: <defaults>
</compile_context>

<pallas_src>
import jax
import jax.numpy as jnp
import numpy as np
from jax.experimental import pallas as pl
from jax.experimental.pallas import tpu as pltpu

# The fixed weight vector from the PyTorch module.
_W = np.array(
    [2.67550209e-05, 8.7932609e-05, 4.33683297e-05, 2.56617851e-05,
     1.62987153e-05, 1.14969637e-05, 8.48186018e-06, 6.5123352e-06],
    dtype=np.float32)
_K = _W.shape[0]            # 8 features per batch
_GROUPS = 128 // _K         # 16 batches packed per 128-lane row
_TR_MAX = 8192              # row tile: 4 MiB f32 input per grid step

# (128, 16) block-diagonal weight-replication matrix: column g holds the 8
# weights in rows 8g..8g+7, so (row of 16 packed batches) @ W_BIG yields the
# 16 per-batch dot products in one MXU pass (groups never mix).
_W_BIG_NP = np.zeros((128, _GROUPS), dtype=np.float32)
for _g in range(_GROUPS):
    _W_BIG_NP[_g * _K:(_g + 1) * _K, _g] = _W


def _hardsigmoid_matvec_kernel(x_ref, w_ref, o_ref):
    # x_ref: (TR, 128) f32 -- lane-dense, 16 batches x 8 features per row
    # w_ref: (128, 16) f32 -- block-diagonal weight replication
    # o_ref: (TR, 16)  f32 -- per-batch results (16 batches per row)
    s = jnp.dot(x_ref[...], w_ref[...], preferred_element_type=jnp.float32)
    o_ref[...] = jnp.clip(s + 3.0, 0.0, 6.0) * (1.0 / 6.0)


@jax.jit
def model_forward(x1: jax.Array) -> jax.Array:
    """x1: (B, C, H, W) with C*H*W == 8. Returns (B,) float32."""
    B = x1.shape[0]
    feat = 1
    for d in x1.shape[1:]:
        feat *= d
    assert feat == _K, f"flattened feature dim {feat} must equal {_K}"

    # flatten(start_dim=1) + flat view; layout-preserving (no copy for f32).
    flat = x1.reshape(-1).astype(jnp.float32)          # (B*8,)
    n = B * _K
    R = -(-n // 128)                                   # rows of 128 lanes
    n_pad = R * 128
    if n_pad != n:
        # Only the ragged-B path pays this pass; B % 16 == 0 is zero-copy.
        flat = jnp.pad(flat, (0, n_pad - n))
    xv = flat.reshape(R, 128)                          # lane-dense view

    tr = R if R <= _TR_MAX else _TR_MAX
    grid = (pl.cdiv(R, tr),)

    out = pl.pallas_call(
        _hardsigmoid_matvec_kernel,
        out_shape=jax.ShapeDtypeStruct((R, _GROUPS), jnp.float32),
        grid_spec=pl.GridSpec(
            grid=grid,
            in_specs=[
                pl.BlockSpec((tr, 128), lambda i: (i, 0)),
                pl.BlockSpec((128, _GROUPS), lambda i: (0, 0)),
            ],
            out_specs=pl.BlockSpec((tr, _GROUPS), lambda i: (i, 0)),
        ),
        compiler_params=pltpu.CompilerParams(
            # Single B-tile axis; independent blocks.
            # TODO(synk): on v7x, CORE_PARALLEL / pl.core_map could split the
            # row tiles across the two TensorCores for up to 2x throughput.
            dimension_semantics=("parallel",),
            vmem_limit_bytes=32 * 1024 * 1024,
        ),
    )(xv, jnp.asarray(_W_BIG_NP))

    flat_out = out.reshape(-1)                         # (R*16,)
    return flat_out[:B] if flat_out.shape[0] != B else flat_out


def _reference(x1: jax.Array) -> jax.Array:
    w = jnp.asarray(_W)
    v1 = x1.reshape(x1.shape[0], -1).astype(jnp.float32)
    return jnp.clip(v1 @ w + 3.0, 0.0, 6.0) / 6.0


if __name__ == "__main__":
    key = jax.random.PRNGKey(0)

    # Small, shape-consistent input: (batch=2, channels=8, H=1, W=1).
    x1 = jax.random.normal(key, (2, 8, 1, 1), dtype=jnp.float32)
    y = model_forward(x1)
    jax.block_until_ready(y)
    assert y.shape == (2,)
    assert jnp.allclose(y, _reference(x1), atol=1e-5, rtol=1e-5)

    # Zero-copy path (B % 16 == 0, no pad, metadata-only reshape).
    x1b = jax.random.normal(jax.random.PRNGKey(1), (64, 8, 1, 1), dtype=jnp.float32)
    yb = model_forward(x1b)
    jax.block_until_ready(yb)
    assert yb.shape == (64,)
    assert jnp.allclose(yb, _reference(x1b), atol=1e-5, rtol=1e-5)

    # Ragged-B path (pad + output slice).
    x1c = jax.random.normal(jax.random.PRNGKey(2), (300, 8, 1, 1), dtype=jnp.float32)
    yc = model_forward(x1c)
    jax.block_until_ready(yc)
    assert yc.shape == (300,)
    assert jnp.allclose(yc, _reference(x1c), atol=1e-5, rtol=1e-5)

    print("KERNEL_OK")
</pallas_src>

<mosaic_0001>
module attributes {stable_mosaic.version = 11 : i64} {
  func.func @_hardsigmoid_matvec_kernel(%arg0: i32, %arg1: memref<1x128xf32, #tpu.memory_space<vmem>>, %arg2: memref<128x16xf32, #tpu.memory_space<vmem>>, %arg3: memref<1x16xf32, #tpu.memory_space<vmem>>) attributes {dimension_semantics = [#tpu.dimension_semantics<parallel>], iteration_bounds = array<i64: 1>, scalar_prefetch = 0 : i64, scratch_operands = 0 : i64, tpu.core_type = #tpu.core_type<tc>, window_params = [{transform_indices = @transform_0, window_bounds = array<i64: 1, 128>}, {pipeline_mode = #tpu.pipeline_mode<synchronous>, transform_indices = @transform_1, window_bounds = array<i64: 128, 16>}, {transform_indices = @transform_2, window_bounds = array<i64: 1, 16>}]} {
    %c0 = arith.constant 0 : index
    %c0_0 = arith.constant 0 : index
    %0 = vector.load %arg1[%c0, %c0_0] : memref<1x128xf32, #tpu.memory_space<vmem>>, vector<1x128xf32>
    %c0_1 = arith.constant 0 : index
    %c0_2 = arith.constant 0 : index
    %1 = vector.load %arg2[%c0_1, %c0_2] : memref<128x16xf32, #tpu.memory_space<vmem>>, vector<128x16xf32>
    %cst = arith.constant dense<0.000000e+00> : vector<1x16xf32>
    %2 = tpu.matmul %0, %1, %cst {dimension_numbers = #tpu.dot_dimension_numbers<[1], [0], [0], [1], [0, 0, 1, 1], [], []>} : vector<1x128xf32>, vector<128x16xf32>, vector<1x16xf32> -> vector<1x16xf32>
    %cst_3 = arith.constant 3.000000e+00 : f32
    %3 = vector.broadcast %cst_3 : f32 to vector<1x16xf32>
    %4 = arith.addf %2, %3 : vector<1x16xf32>
    %cst_4 = arith.constant 0.000000e+00 : f32
    %cst_5 = arith.constant 6.000000e+00 : f32
    %5 = vector.broadcast %cst_4 : f32 to vector<1x16xf32>
    %6 = arith.maximumf %5, %4 : vector<1x16xf32>
    %7 = vector.broadcast %cst_5 : f32 to vector<1x16xf32>
    %8 = arith.minimumf %7, %6 : vector<1x16xf32>
    %cst_6 = arith.constant 0.166666672 : f32
    %9 = vector.broadcast %cst_6 : f32 to vector<1x16xf32>
    %10 = arith.mulf %8, %9 : vector<1x16xf32>
    %c0_7 = arith.constant 0 : index
    %c0_8 = arith.constant 0 : index
    %11 = vector.load %arg3[%c0_7, %c0_8] : memref<1x16xf32, #tpu.memory_space<vmem>>, vector<1x16xf32>
    tpu.vector_store %arg3[%c0_7, %c0_8], %10 {strides = array<i32>} : memref<1x16xf32, #tpu.memory_space<vmem>>, vector<1x16xf32>,
    return
  }
  func.func @transform_0(%arg0: i32) -> (i32, i32) {
    %c0_i32 = arith.constant 0 : i32
    %c0_i32_0 = arith.constant 0 : i32
    return %arg0, %c0_i32 : i32, i32
  }
  func.func @transform_1(%arg0: i32) -> (i32, i32) {
    %c0_i32 = arith.constant 0 : i32
    %c0_i32_0 = arith.constant 0 : i32
    %c0_i32_1 = arith.constant 0 : i32
    return %c0_i32, %c0_i32_0 : i32, i32
  }
  func.func @transform_2(%arg0: i32) -> (i32, i32) {
    %c0_i32 = arith.constant 0 : i32
    %c0_i32_0 = arith.constant 0 : i32
    return %arg0, %c0_i32 : i32, i32
  }
}

</mosaic_0001>

<llo_original>
// kernel: model_forward.1
$region0: #{model_forward.1}
  #allocation0 [shape = 'u32[]', space=smem, size = 0x4, offset = 0x4, fixed_abs, tag = 'smem constant byte address 0x4 - core index']
  #allocation1 [shape = 'u32[72,128]{1,0:T(1,128)}', space=vmem, size = 0x9000, scoped, tag = 'internal scratch']
  %s0 = inlined_call_operand.vmem [shape: f32[1,128], index: 0, kind: input, shape index: {}]
  %s1 = inlined_call_operand.hbm [shape: f32[128,16], index: 1, kind: input, shape index: {}]
  %s2 = inlined_call_operand.vmem [shape: f32[1,16], index: 2, kind: output, shape index: {}]
  %s3 = sld [smem:[#allocation0]]
  $region22: #{model_forward.1} parent=0
    _
  %s5 = ssub.s32 1, %s3
  %s6 = scalar_select 0, %s5, %s3
  $region1: #{model_forward.1} parent=0
    #allocation2 [shape = 'u8[65536]{0}', space=vmem, size = 0x10000, scoped, tag = 'input window, operand 1, single buffered']
    #allocation3 [shape = 's32[1]{0}', space=sflag, size = 0x4, scoped, tag = 'scoped memory for model_forward.1']
    %7 = vsyncpa [#allocation3], 0
    // Predicated region
    $region2: #{model_forward.1} parent=1 // pred_check
      _
    $region3: #{model_forward.1} parent=1 // pred_check_branch
      %9 = sbr.rel (0) target = $region5
    $region4: #{model_forward.1} parent=1 // pred_region
      _
    $region5: #{model_forward.1} parent=1 // pred_fallthru
      _
    // Predicated region
    $region6: #{model_forward.1} parent=1 // pred_check
      _
    $region7: #{model_forward.1} parent=1 // pred_check_branch
      %11 = sbr.rel (0) target = $region9
    $region8: #{model_forward.1} parent=1 // pred_region
      %13 = vsyncadd [#allocation3], 0
      %s14 = sshll.u32 %s1, 4
      %s15 = int_to_ptr.hbm [resolvable:$true] %s14
      %s16 = sshll.u32 [#allocation2], 4
      %s17 = int_to_ptr.vmem [resolvable:$true] %s16
      %22 = dma.hbm_to_vmem [thread:$0]  %s15, 2048, %s17, [#allocation3], 128, 128, 8
    $region9: #{model_forward.1} parent=1 // pred_fallthru
      _
    // Predicated region
    $region10: #{model_forward.1} parent=1 // pred_check
      _
    $region11: #{model_forward.1} parent=1 // pred_check_branch
      %24 = sbr.rel (0) target = $region13
    $region12: #{model_forward.1} parent=1 // pred_region
      %26 = dma.done [#allocation3], 2048
    $region13: #{model_forward.1} parent=1 // pred_fallthru
      _
    %v27 = vld [vmem:[%s0] sm:$0x1]
    %v28 = vld [vmem:[#allocation2] sm:$0xff]
    %v29 = vld [vmem:[#allocation2 + $0x8] sm:$0xff]
    %v30 = vld [vmem:[#allocation2 + $0x10] sm:$0xff]
    %v31 = vld [vmem:[#allocation2 + $0x18] sm:$0xff]
    %v32 = vld [vmem:[#allocation2 + $0x20] sm:$0xff]
    %v33 = vld [vmem:[#allocation2 + $0x28] sm:$0xff]
    %v34 = vld [vmem:[#allocation2 + $0x30] sm:$0xff]
    %v35 = vld [vmem:[#allocation2 + $0x38] sm:$0xff]
    %v36 = vld [vmem:[#allocation2 + $0x40] sm:$0xff]
    %v37 = vld [vmem:[#allocation2 + $0x48] sm:$0xff]
    %v38 = vld [vmem:[#allocation2 + $0x50] sm:$0xff]
    %v39 = vld [vmem:[#allocation2 + $0x58] sm:$0xff]
    %v40 = vld [vmem:[#allocation2 + $0x60] sm:$0xff]
    %v41 = vld [vmem:[#allocation2 + $0x68] sm:$0xff]
    %v42 = vld [vmem:[#allocation2 + $0x70] sm:$0xff]
    %v43 = vld [vmem:[#allocation2 + $0x78] sm:$0xff]
    %44 = vmatpush.msra.mxu0 %v43
    %45 = vmatpush.msra.mxu0 %v42
    %46 = vmatpush.msra.mxu0 %v41
    %47 = vmatpush.msra.mxu0 %v40
    %48 = vmatpush.msra.mxu0 %v39
    %49 = vmatpush.msra.mxu0 %v38
    %50 = vmatpush.msra.mxu0 %v37
    %51 = vmatpush.msra.mxu0 %v36
    %52 = vmatpush.msra.mxu0 %v35
    %53 = vmatpush.msra.mxu0 %v34
    %54 = vmatpush.msra.mxu0 %v33
    %55 = vmatpush.msra.mxu0 %v32
    %56 = vmatpush.msra.mxu0 %v31
    %57 = vmatpush.msra.mxu0 %v30
    %58 = vmatpush.msra.mxu0 %v29
    %59 = vmatpush.msra.mxu0 %v28
    %60 = vmatmul.f32.gmra.mxu0 %v27
    %v61 = vpop.f32.mrf.mxu0
    %v62 = vadd.f32 3.0, %v61
    %63 = vdwg.mxu0
    %v64 = vmax.f32 %v62, 0.0
    %v65 = vmin.f32 %v64, 6.0
    %v66 = vmul.f32 %v65, 0.16666667
    %vm67 = vcmask 122880
    %68 = vst.msk [vmem:[%s2] sm:$0x1] %vm67, %v66
    // Predicated region
    $region14: #{model_forward.1} parent=1 // pred_check
      _
    $region15: #{model_forward.1} parent=1 // pred_check_branch
      %70 = sbr.rel (0) target = $region17
    $region16: #{model_forward.1} parent=1 // pred_region
      _
    $region17: #{model_forward.1} parent=1 // pred_fallthru
      _
    // Predicated region
    $region18: #{model_forward.1} parent=1 // pred_check
      _
    $region19: #{model_forward.1} parent=1 // pred_check_branch
      %72 = sbr.rel (0) target = $region21
    $region20: #{model_forward.1} parent=1 // pred_region
      _
    $region21: #{model_forward.1} parent=1 // pred_fallthru
      _
    %73 = vsyncpa [#allocation3], 1

</llo_original>
